<compile_context>
chip_gen: v7x
topology: tpu7x:2x2x1
jax: 0.10.0
libtpu: 0.0.40
codegen_flags: <defaults>
</compile_context>

<pallas_src>
import functools

import jax
import jax.numpy as jnp
from jax import lax
from jax.experimental import pallas as pl
from jax.experimental.pallas import tpu as pltpu


def _round_up(v, m):
    return ((v + m - 1) // m) * m


def _block_diag(w, fold):
    """fold copies of w (in, out) on the diagonal -> (fold*in, fold*out)."""
    if fold == 1:
        return w
    fi, fo = w.shape
    out = jnp.zeros((fold * fi, fold * fo), w.dtype)
    for k in range(fold):
        out = out.at[k * fi:(k + 1) * fi, k * fo:(k + 1) * fo].set(w)
    return out


def _default_fold():
    # v5e MXU is 128 wide -> fold=2 keeps every K/N <= 128 (single pass);
    # v6e/v7x MXUs are 256 wide -> fold=4.
    try:
        kind = jax.devices()[0].device_kind.lower()
        if "v5 lite" in kind or "v5e" in kind or "v5lite" in kind:
            return 2
    except Exception:
        pass
    return 4


def _mlp_kernel(x_ref, w1_ref, b1_ref, w2_ref, b2_ref, w3_ref, b3_ref, o_ref,
                *, chunk, n_chunks, compute_dtype):
    # One grid step owns a (bm_f, F*fold) slab of folded-batch rows.  It is processed
    # in `chunk`-row sub-slabs so live f32 intermediates stay small while the DMA
    # tile (the whole slab) stays large enough to amortize per-grid-step overhead.
    def compute(xs):
        # f32 -> bf16 cast happens here (VPU, hidden under MXU); x was DMA'd once
        # as f32 straight from HBM (no wrapper-side cast/pad HBM passes).
        h = jnp.dot(xs.astype(compute_dtype), w1_ref[...],
                    preferred_element_type=jnp.float32)
        h = jnp.maximum(h + b1_ref[...], 0.0).astype(compute_dtype)
        h = jnp.dot(h, w2_ref[...], preferred_element_type=jnp.float32)
        h = jnp.maximum(h + b2_ref[...], 0.0).astype(compute_dtype)
        return jnp.dot(h, w3_ref[...], preferred_element_type=jnp.float32) + b3_ref[...]

    if n_chunks == 1:
        o_ref[...] = compute(x_ref[...]).astype(o_ref.dtype)
    else:
        def body(c, carry):
            r0 = pl.multiple_of(c * chunk, 8)
            o_ref[pl.ds(r0, chunk), :] = compute(
                x_ref[pl.ds(r0, chunk), :]).astype(o_ref.dtype)
            return carry
        lax.fori_loop(0, n_chunks, body, None, unroll=n_chunks <= 8)


def mlp_net2(x, w1, b1, w2, b2, w3, b3, *, bm=2048, fold=None, chunk_rows=1024,
             compute_dtype=jnp.bfloat16, core_parallel_batch=False):
    """MlpNet2 forward: relu(x@W1+b1) -> relu(.@W2+b2) -> .@W3+b3.

    x: (B, F) float32; w_i: (in, out) [transposed vs torch]; b_i: (out,) or (1, out).
    bm: batch rows per grid step (sweep 2048..8192; keep >=2 steps, >=4 on v7x).
    fold: batch rows folded into one lane-row (block-diag weights); 4 on v6e/v7x,
          2 on v5e by default.
    chunk_rows: batch rows per in-kernel compute sub-slab.
    core_parallel_batch: v7x only - shard the batch grid axis across TensorCores.
    """
    B, F = x.shape
    H1, H2, L = w1.shape[1], w2.shape[1], w3.shape[1]
    out_dtype = x.dtype

    if fold is None:
        fold = _default_fold()
    fold = max(int(fold), 1)

    # Fold `fold` batch rows into one lane-row.  The reshape is a pure row-major
    # relabel (free under jit); x is only padded when B is not a fold multiple.
    b_pad = _round_up(B, fold)
    x_f = x if b_pad == B else jnp.pad(x, ((0, b_pad - B), (0, 0)))
    bf_total = b_pad // fold
    x_f = x_f.reshape(bf_total, F * fold)

    # Block-diagonal bf16 weights + fold-tiled f32 biases.  ~220 KB total at fold=4:
    # VMEM-trivial, fetched once (constant index maps), resident across the grid.
    w1_bd = _block_diag(w1, fold).astype(compute_dtype)
    w2_bd = _block_diag(w2, fold).astype(compute_dtype)
    w3_bd = _block_diag(w3, fold).astype(compute_dtype)
    b1_t = jnp.tile(jnp.asarray(b1, jnp.float32).reshape(1, -1), (1, fold))
    b2_t = jnp.tile(jnp.asarray(b2, jnp.float32).reshape(1, -1), (1, fold))
    b3_t = jnp.tile(jnp.asarray(b3, jnp.float32).reshape(1, -1), (1, fold))

    # Grid block (bm_f folded rows) and in-kernel compute chunk; both sublane (8)
    # aligned, and chunk divides bm_f by construction.
    bm_f = _round_up(max(min(bm // fold, bf_total), 1), 8)
    chunk = min(_round_up(max(chunk_rows // fold, 1), 8), bm_f)
    bm_f = _round_up(bm_f, chunk)
    n_chunks = bm_f // chunk
    grid = (pl.cdiv(bf_total, bm_f),)  # ragged last block: junk rows on read,
                                       # masked (never stored) on write-back.

    kernel = functools.partial(_mlp_kernel, chunk=chunk, n_chunks=n_chunks,
                               compute_dtype=compute_dtype)

    fi, h1f, h2f, lf = F * fold, H1 * fold, H2 * fold, L * fold
    dim_sem = (pltpu.CORE_PARALLEL,) if core_parallel_batch else ("parallel",)

    out = pl.pallas_call(
        kernel,
        out_shape=jax.ShapeDtypeStruct((bf_total, lf), out_dtype),
        grid_spec=pltpu.PrefetchScalarGridSpec(
            num_scalar_prefetch=0,
            grid=grid,
            in_specs=[
                pl.BlockSpec((bm_f, fi), lambda i: (i, 0)),   # x slab (f32, pipelined)
                pl.BlockSpec((fi, h1f), lambda i: (0, 0)),    # W1_bd (VMEM-resident)
                pl.BlockSpec((1, h1f), lambda i: (0, 0)),     # b1
                pl.BlockSpec((h1f, h2f), lambda i: (0, 0)),   # W2_bd
                pl.BlockSpec((1, h2f), lambda i: (0, 0)),     # b2
                pl.BlockSpec((h2f, lf), lambda i: (0, 0)),    # W3_bd
                pl.BlockSpec((1, lf), lambda i: (0, 0)),      # b3
            ],
            out_specs=pl.BlockSpec((bm_f, lf), lambda i: (i, 0)),
        ),
        compiler_params=pltpu.CompilerParams(
            dimension_semantics=dim_sem,
            # Default scoped VMEM is ample: at bm=8192/fold=4 the x slab is 1 MB f32
            # (x2 buffers) + ~0.5 MB weights + ~0.5 MB output (x2).  Only raise
            # vmem_limit_bytes if sweeping bm far past ~32K rows on v7x.
        ),
    )(x_f, w1_bd, b1_t, w2_bd, b2_t, w3_bd, b3_t)

    out = out.reshape(b_pad, L)   # row-major unfold back to (B, L): free
    return out if b_pad == B else out[:B]


def _init_linear(key, fan_in, fan_out, dtype=jnp.float32):
    # Deterministic init mimicking nn.Linear's uniform(-1/sqrt(fan_in), 1/sqrt(fan_in)).
    kw, kb = jax.random.split(key)
    bound = 1.0 / jnp.sqrt(jnp.asarray(fan_in, dtype))
    w = jax.random.uniform(kw, (fan_in, fan_out), dtype, -bound, bound)  # stored (in, out)
    b = jax.random.uniform(kb, (1, fan_out), dtype, -bound, bound)
    return w, b


def _ref_forward(x, w1, b1, w2, b2, w3, b3, compute_dtype=jnp.bfloat16):
    # Pure-JAX reference matching the kernel's numerics (bf16 operands, f32 accum).
    h = jnp.dot(x.astype(compute_dtype), w1.astype(compute_dtype),
                preferred_element_type=jnp.float32) + b1
    h = jnp.maximum(h, 0.0).astype(compute_dtype)
    h = jnp.dot(h, w2.astype(compute_dtype),
                preferred_element_type=jnp.float32) + b2
    h = jnp.maximum(h, 0.0).astype(compute_dtype)
    return jnp.dot(h, w3.astype(compute_dtype),
                   preferred_element_type=jnp.float32) + b3


if __name__ == "__main__":
    # Shapes implied by the module: NumOfFeature=32, H1=64, H2=64, NumOfLabel=16.
    # Smoke test uses deliberately tiny tiles (production default is bm=2048) to
    # exercise (a) a multi-step grid with a ragged last block and (b) the in-kernel
    # multi-chunk fori_loop path.
    B, F, H1, H2, L = 200, 32, 64, 64, 16

    key = jax.random.PRNGKey(0)
    kx, k1, k2, k3 = jax.random.split(key, 4)

    x = jax.random.normal(kx, (B, F), jnp.float32)
    w1, b1 = _init_linear(k1, F, H1)
    w2, b2 = _init_linear(k2, H1, H2)
    w3, b3 = _init_linear(k3, H2, L)

    ref = _ref_forward(x, w1, b1, w2, b2, w3, b3)

    # (a) multi-step grid, single compute chunk per step.
    out_a = jax.block_until_ready(mlp_net2(x, w1, b1, w2, b2, w3, b3, bm=128))
    # (b) single grid step, several compute chunks (fori_loop path), ragged block.
    out_b = jax.block_until_ready(
        mlp_net2(x, w1, b1, w2, b2, w3, b3, bm=256, chunk_rows=64))

    for out in (out_a, out_b):
        assert out.shape == (B, L)
        assert jnp.allclose(out, ref, atol=1e-2, rtol=1e-2), (
            float(jnp.max(jnp.abs(out - ref))))

    print("KERNEL_OK")
</pallas_src>

<mosaic_0001>
module attributes {stable_mosaic.version = 11 : i64} {
  func.func @_mlp_kernel(%arg0: i32, %arg1: memref<32x128xf32, #tpu.memory_space<vmem>>, %arg2: memref<128x256xbf16, #tpu.memory_space<vmem>>, %arg3: memref<1x256xf32, #tpu.memory_space<vmem>>, %arg4: memref<256x256xbf16, #tpu.memory_space<vmem>>, %arg5: memref<1x256xf32, #tpu.memory_space<vmem>>, %arg6: memref<256x64xbf16, #tpu.memory_space<vmem>>, %arg7: memref<1x64xf32, #tpu.memory_space<vmem>>, %arg8: memref<32x64xf32, #tpu.memory_space<vmem>>) attributes {dimension_semantics = [#tpu.dimension_semantics<parallel>], iteration_bounds = array<i64: 2>, scalar_prefetch = 0 : i64, scratch_operands = 0 : i64, tpu.core_type = #tpu.core_type<tc>, window_params = [{transform_indices = @transform_0, window_bounds = array<i64: 32, 128>}, {pipeline_mode = #tpu.pipeline_mode<synchronous>, transform_indices = @transform_1, window_bounds = array<i64: 128, 256>}, {pipeline_mode = #tpu.pipeline_mode<synchronous>, transform_indices = @transform_2, window_bounds = array<i64: 1, 256>}, {pipeline_mode = #tpu.pipeline_mode<synchronous>, transform_indices = @transform_3, window_bounds = array<i64: 256, 256>}, {pipeline_mode = #tpu.pipeline_mode<synchronous>, transform_indices = @transform_4, window_bounds = array<i64: 1, 256>}, {pipeline_mode = #tpu.pipeline_mode<synchronous>, transform_indices = @transform_5, window_bounds = array<i64: 256, 64>}, {pipeline_mode = #tpu.pipeline_mode<synchronous>, transform_indices = @transform_6, window_bounds = array<i64: 1, 64>}, {transform_indices = @transform_7, window_bounds = array<i64: 32, 64>}]} {
    %c0 = arith.constant 0 : index
    %c0_0 = arith.constant 0 : index
    %0 = vector.load %arg1[%c0, %c0_0] : memref<32x128xf32, #tpu.memory_space<vmem>>, vector<32x128xf32>
    %1 = arith.truncf %0 : vector<32x128xf32> to vector<32x128xbf16>
    %c0_1 = arith.constant 0 : index
    %c0_2 = arith.constant 0 : index
    %2 = vector.load %arg2[%c0_1, %c0_2] : memref<128x256xbf16, #tpu.memory_space<vmem>>, vector<128x256xbf16>
    %cst = arith.constant dense<0.000000e+00> : vector<32x256xf32>
    %3 = tpu.matmul %1, %2, %cst {dimension_numbers = #tpu.dot_dimension_numbers<[1], [0], [0], [1], [0, 0, 1, 1], [], []>} : vector<32x128xbf16>, vector<128x256xbf16>, vector<32x256xf32> -> vector<32x256xf32>
    %c0_3 = arith.constant 0 : index
    %c0_4 = arith.constant 0 : index
    %4 = vector.load %arg3[%c0_3, %c0_4] : memref<1x256xf32, #tpu.memory_space<vmem>>, vector<1x256xf32>
    %5 = vector.broadcast %4 : vector<1x256xf32> to vector<32x256xf32>
    %6 = arith.addf %3, %5 : vector<32x256xf32>
    %cst_5 = arith.constant 0.000000e+00 : f32
    %7 = vector.broadcast %cst_5 : f32 to vector<32x256xf32>
    %8 = arith.maximumf %6, %7 : vector<32x256xf32>
    %9 = arith.truncf %8 : vector<32x256xf32> to vector<32x256xbf16>
    %c0_6 = arith.constant 0 : index
    %c0_7 = arith.constant 0 : index
    %10 = vector.load %arg4[%c0_6, %c0_7] : memref<256x256xbf16, #tpu.memory_space<vmem>>, vector<256x256xbf16>
    %cst_8 = arith.constant dense<0.000000e+00> : vector<32x256xf32>
    %11 = tpu.matmul %9, %10, %cst_8 {dimension_numbers = #tpu.dot_dimension_numbers<[1], [0], [0], [1], [0, 0, 1, 1], [], []>} : vector<32x256xbf16>, vector<256x256xbf16>, vector<32x256xf32> -> vector<32x256xf32>
    %c0_9 = arith.constant 0 : index
    %c0_10 = arith.constant 0 : index
    %12 = vector.load %arg5[%c0_9, %c0_10] : memref<1x256xf32, #tpu.memory_space<vmem>>, vector<1x256xf32>
    %13 = vector.broadcast %12 : vector<1x256xf32> to vector<32x256xf32>
    %14 = arith.addf %11, %13 : vector<32x256xf32>
    %cst_11 = arith.constant 0.000000e+00 : f32
    %15 = vector.broadcast %cst_11 : f32 to vector<32x256xf32>
    %16 = arith.maximumf %14, %15 : vector<32x256xf32>
    %17 = arith.truncf %16 : vector<32x256xf32> to vector<32x256xbf16>
    %c0_12 = arith.constant 0 : index
    %c0_13 = arith.constant 0 : index
    %18 = vector.load %arg6[%c0_12, %c0_13] : memref<256x64xbf16, #tpu.memory_space<vmem>>, vector<256x64xbf16>
    %cst_14 = arith.constant dense<0.000000e+00> : vector<32x64xf32>
    %19 = tpu.matmul %17, %18, %cst_14 {dimension_numbers = #tpu.dot_dimension_numbers<[1], [0], [0], [1], [0, 0, 1, 1], [], []>} : vector<32x256xbf16>, vector<256x64xbf16>, vector<32x64xf32> -> vector<32x64xf32>
    %c0_15 = arith.constant 0 : index
    %c0_16 = arith.constant 0 : index
    %20 = vector.load %arg7[%c0_15, %c0_16] : memref<1x64xf32, #tpu.memory_space<vmem>>, vector<1x64xf32>
    %21 = vector.broadcast %20 : vector<1x64xf32> to vector<32x64xf32>
    %22 = arith.addf %19, %21 : vector<32x64xf32>
    %c0_17 = arith.constant 0 : index
    %c0_18 = arith.constant 0 : index
    %23 = vector.load %arg8[%c0_17, %c0_18] : memref<32x64xf32, #tpu.memory_space<vmem>>, vector<32x64xf32>
    tpu.vector_store %arg8[%c0_17, %c0_18], %22 {strides = array<i32>} : memref<32x64xf32, #tpu.memory_space<vmem>>, vector<32x64xf32>,
    return
  }
  func.func @transform_0(%arg0: i32) -> (i32, i32) {
    %c0_i32 = arith.constant 0 : i32
    %c0_i32_0 = arith.constant 0 : i32
    return %arg0, %c0_i32 : i32, i32
  }
  func.func @transform_1(%arg0: i32) -> (i32, i32) {
    %c0_i32 = arith.constant 0 : i32
    %c0_i32_0 = arith.constant 0 : i32
    %c0_i32_1 = arith.constant 0 : i32
    return %c0_i32, %c0_i32_0 : i32, i32
  }
  func.func @transform_2(%arg0: i32) -> (i32, i32) {
    %c0_i32 = arith.constant 0 : i32
    %c0_i32_0 = arith.constant 0 : i32
    %c0_i32_1 = arith.constant 0 : i32
    return %c0_i32, %c0_i32_0 : i32, i32
  }
  func.func @transform_3(%arg0: i32) -> (i32, i32) {
    %c0_i32 = arith.constant 0 : i32
    %c0_i32_0 = arith.constant 0 : i32
    %c0_i32_1 = arith.constant 0 : i32
    return %c0_i32, %c0_i32_0 : i32, i32
  }
  func.func @transform_4(%arg0: i32) -> (i32, i32) {
    %c0_i32 = arith.constant 0 : i32
    %c0_i32_0 = arith.constant 0 : i32
    %c0_i32_1 = arith.constant 0 : i32
    return %c0_i32, %c0_i32_0 : i32, i32
  }
  func.func @transform_5(%arg0: i32) -> (i32, i32) {
    %c0_i32 = arith.constant 0 : i32
    %c0_i32_0 = arith.constant 0 : i32
    %c0_i32_1 = arith.constant 0 : i32
    return %c0_i32, %c0_i32_0 : i32, i32
  }
  func.func @transform_6(%arg0: i32) -> (i32, i32) {
    %c0_i32 = arith.constant 0 : i32
    %c0_i32_0 = arith.constant 0 : i32
    %c0_i32_1 = arith.constant 0 : i32
    return %c0_i32, %c0_i32_0 : i32, i32
  }
  func.func @transform_7(%arg0: i32) -> (i32, i32) {
    %c0_i32 = arith.constant 0 : i32
    %c0_i32_0 = arith.constant 0 : i32
    return %arg0, %c0_i32 : i32, i32
  }
}

</mosaic_0001>

<llo_original>
// kernel: tpu_custom_call.1
$region0: #{tpu_custom_call.1}
  #allocation0 [shape = 'u32[]', space=smem, size = 0x4, offset = 0x4, fixed_abs, tag = 'smem constant byte address 0x4 - core index']
  #allocation1 [shape = 'u32[144,128]{1,0:T(1,128)}', space=vmem, size = 0x12000, scoped, tag = 'internal scratch']
  %s0 = inlined_call_operand.vmem [shape: f32[50,128], index: 0, kind: input, shape index: {}]
  %s1 = inlined_call_operand.vmem [shape: bf16[128,256], index: 1, kind: input, shape index: {}]
  %s2 = inlined_call_operand.vmem [shape: f32[1,256], index: 2, kind: input, shape index: {}]
  %s3 = inlined_call_operand.hbm [shape: bf16[256,256], index: 3, kind: input, shape index: {}]
  %s4 = inlined_call_operand.vmem [shape: f32[1,256], index: 4, kind: input, shape index: {}]
  %s5 = inlined_call_operand.vmem [shape: bf16[256,64], index: 5, kind: input, shape index: {}]
  %s6 = inlined_call_operand.vmem [shape: f32[1,64], index: 6, kind: input, shape index: {}]
  %s7 = inlined_call_operand.hbm [shape: f32[50,64], index: 7, kind: output, shape index: {}]
  %s8 = sld [smem:[#allocation0]]
  $region65: #{tpu_custom_call.1} parent=0
    _
  %s10 = ssub.s32 1, %s8
  %s11 = scalar_select 0, %s10, %s8
  $region1: #{tpu_custom_call.1} parent=0
    #allocation2 [shape = 'u8[131072]{0}', space=vmem, size = 0x20000, scoped, tag = 'input window, operand 3, single buffered']
    #allocation3 [shape = 's32[2]{0}', space=sflag, size = 0x8, scoped, tag = 'scoped memory for tpu_custom_call.1']
    #allocation4 [shape = 's32[2]{0}', space=sflag, size = 0x8, scoped, tag = 'scoped memory for tpu_custom_call.1']
    #allocation5 [shape = 'u8[32768]{0}', space=vmem, size = 0x8000, scoped, tag = 'output window, operand 0']
    %12 = vsyncpa [#allocation3], 0
    %13 = vsyncpa [#allocation4], 0
    %s14 = scalar_lea.sflag [#allocation4], 1
    %15 = vsyncpa %s14, 0
    loop: start=0, step=1, limit=4
    $region2: #{tpu_custom_call.1} parent=1 // loop_pre_header
      _
    $region3: #{tpu_custom_call.1} parent=1 // loop_header
      %s17 = sphi 0, %s21
      %p18 = scmp.ge.s32.totalorder %s17, 4
      %s27 = sphi 0, %s29
      %s30 = sphi 0, %s27
      %s31 = sphi 0, %s30
      %s47 = sphi 0, %s31
      %s51 = sphi 0, %s51
      %s53 = sphi 0, %s51
      %s54 = sphi 0, %s53
      %s68 = sphi 0, %s54
      %s72 = sphi 0, %s72
      %s74 = sphi 0, %s72
      %s75 = sphi 0, %s74
      %s89 = sphi 0, %s75
      %s93 = sphi 0, %s93
      %s95 = sphi 0, %s93
      %s96 = sphi 0, %s95
      %s110 = sphi 0, %s96
      %s114 = sphi 0, %s114
      %s116 = sphi 0, %s114
      %s117 = sphi 0, %s116
      %s131 = sphi 0, %s117
      %s135 = sphi 0, %s135
      %s137 = sphi 0, %s135
      %s138 = sphi 0, %s137
      %s152 = sphi 0, %s138
      %s156 = sphi 0, %s156
      %s158 = sphi 0, %s156
      %s159 = sphi 0, %s158
      %s173 = sphi 0, %s159
      %s179 = sphi 0, %s181
      %s182 = sphi 0, %s179
      %s183 = sphi 0, %s182
      %s199 = sphi 0, %s183
    $region4: #{tpu_custom_call.1} parent=1 // loop_header_branch
      %20 = sbr.rel (%p18) target = $region8
    $region5: #{tpu_custom_call.1} parent=1 // loop_body
      %s22 = ssub.s32 %s17, 1
      %s23 = ssub.s32 %s17, 2
      %s24 = sadd.s32 %s17, 1
      %s25 = ssub.s32 %s17, %s24
      %p26 = scmp.eq.s32.totalorder %s25, 0
      %s28 = sadd.s32 %s27, 1
      %s29 = scalar_select %p26, %s27, %s28
      %p32 = pneg %p26
      %p33 = scmp.eq.s32.totalorder %s17, 1
      %p34 = por %p32, %p33
      %p35 = scmp.ne.s32.totalorder %s27, %s30
      %p36 = scmp.eq.s32.totalorder %s17, 0
      %p37 = por %p35, %p36
      %p38 = scmp.ne.s32.totalorder %s27, %s30
      %p39 = scmp.eq.s32.totalorder %s22, 1
      %p40 = por %p38, %p39
      %p41 = scmp.ne.s32.totalorder %s30, %s31
      %p42 = scmp.eq.s32.totalorder %s22, 0
      %p43 = por %p41, %p42
      %p44 = scmp.ne.s32.totalorder %s30, %s31
      %p45 = scmp.eq.s32.totalorder %s23, 1
      %p46 = por %p44, %p45
      %p48 = scmp.ne.s32.totalorder %s31, %s47
      %p49 = scmp.eq.s32.totalorder %s23, 0
      %p50 = por %p48, %p49
      %s52 = sadd.s32 %s51, 1
      %p55 = scmp.eq.s32.totalorder %s17, 1
      %p56 = scmp.ne.s32.totalorder %s51, %s53
      %p57 = scmp.eq.s32.totalorder %s17, 0
      %p58 = por %p56, %p57
      %p59 = scmp.ne.s32.totalorder %s51, %s53
      %p60 = scmp.eq.s32.totalorder %s22, 1
      %p61 = por %p59, %p60
      %p62 = scmp.ne.s32.totalorder %s53, %s54
      %p63 = scmp.eq.s32.totalorder %s22, 0
      %p64 = por %p62, %p63
      %p65 = scmp.ne.s32.totalorder %s53, %s54
      %p66 = scmp.eq.s32.totalorder %s23, 1
      %p67 = por %p65, %p66
      %p69 = scmp.ne.s32.totalorder %s54, %s68
      %p70 = scmp.eq.s32.totalorder %s23, 0
      %p71 = por %p69, %p70
      %s73 = sadd.s32 %s72, 1
      %p76 = scmp.eq.s32.totalorder %s17, 1
      %p77 = scmp.ne.s32.totalorder %s72, %s74
      %p78 = scmp.eq.s32.totalorder %s17, 0
      %p79 = por %p77, %p78
      %p80 = scmp.ne.s32.totalorder %s72, %s74
      %p81 = scmp.eq.s32.totalorder %s22, 1
      %p82 = por %p80, %p81
      %p83 = scmp.ne.s32.totalorder %s74, %s75
      %p84 = scmp.eq.s32.totalorder %s22, 0
      %p85 = por %p83, %p84
      %p86 = scmp.ne.s32.totalorder %s74, %s75
      %p87 = scmp.eq.s32.totalorder %s23, 1
      %p88 = por %p86, %p87
      %p90 = scmp.ne.s32.totalorder %s75, %s89
      %p91 = scmp.eq.s32.totalorder %s23, 0
      %p92 = por %p90, %p91
      %s94 = sadd.s32 %s93, 1
      %p97 = scmp.eq.s32.totalorder %s17, 1
      %p98 = scmp.ne.s32.totalorder %s93, %s95
      %p99 = scmp.eq.s32.totalorder %s17, 0
      %p100 = por %p98, %p99
      %p101 = scmp.ne.s32.totalorder %s93, %s95
      %p102 = scmp.eq.s32.totalorder %s22, 1
      %p103 = por %p101, %p102
      %p104 = scmp.ne.s32.totalorder %s95, %s96
      %p105 = scmp.eq.s32.totalorder %s22, 0
      %p106 = por %p104, %p105
      %p107 = scmp.ne.s32.totalorder %s95, %s96
      %p108 = scmp.eq.s32.totalorder %s23, 1
      %p109 = por %p107, %p108
      %p111 = scmp.ne.s32.totalorder %s96, %s110
      %p112 = scmp.eq.s32.totalorder %s23, 0
      %p113 = por %p111, %p112
      %s115 = sadd.s32 %s114, 1
      %p118 = scmp.eq.s32.totalorder %s17, 1
      %p119 = scmp.ne.s32.totalorder %s114, %s116
      %p120 = scmp.eq.s32.totalorder %s17, 0
      %p121 = por %p119, %p120
      %p122 = scmp.ne.s32.totalorder %s114, %s116
      %p123 = scmp.eq.s32.totalorder %s22, 1
      %p124 = por %p122, %p123
      %p125 = scmp.ne.s32.totalorder %s116, %s117
      %p126 = scmp.eq.s32.totalorder %s22, 0
      %p127 = por %p125, %p126
      %p128 = scmp.ne.s32.totalorder %s116, %s117
      %p129 = scmp.eq.s32.totalorder %s23, 1
      %p130 = por %p128, %p129
      %p132 = scmp.ne.s32.totalorder %s117, %s131
      %p133 = scmp.eq.s32.totalorder %s23, 0
      %p134 = por %p132, %p133
      %s136 = sadd.s32 %s135, 1
      %p139 = scmp.eq.s32.totalorder %s17, 1
      %p140 = scmp.ne.s32.totalorder %s135, %s137
      %p141 = scmp.eq.s32.totalorder %s17, 0
      %p142 = por %p140, %p141
      %p143 = scmp.ne.s32.totalorder %s135, %s137
      %p144 = scmp.eq.s32.totalorder %s22, 1
      %p145 = por %p143, %p144
      %p146 = scmp.ne.s32.totalorder %s137, %s138
      %p147 = scmp.eq.s32.totalorder %s22, 0
      %p148 = por %p146, %p147
      %p149 = scmp.ne.s32.totalorder %s137, %s138
      %p150 = scmp.eq.s32.totalorder %s23, 1
      %p151 = por %p149, %p150
      %p153 = scmp.ne.s32.totalorder %s138, %s152
      %p154 = scmp.eq.s32.totalorder %s23, 0
      %p155 = por %p153, %p154
      %s157 = sadd.s32 %s156, 1
      %p160 = scmp.eq.s32.totalorder %s17, 1
      %p161 = scmp.ne.s32.totalorder %s156, %s158
      %p162 = scmp.eq.s32.totalorder %s17, 0
      %p163 = por %p161, %p162
      %p164 = scmp.ne.s32.totalorder %s156, %s158
      %p165 = scmp.eq.s32.totalorder %s22, 1
      %p166 = por %p164, %p165
      %p167 = scmp.ne.s32.totalorder %s158, %s159
      %p168 = scmp.eq.s32.totalorder %s22, 0
      %p169 = por %p167, %p168
      %p170 = scmp.ne.s32.totalorder %s158, %s159
      %p171 = scmp.eq.s32.totalorder %s23, 1
      %p172 = por %p170, %p171
      %p174 = scmp.ne.s32.totalorder %s159, %s173
      %p175 = scmp.eq.s32.totalorder %s23, 0
      %p176 = por %p174, %p175
      %s177 = ssub.s32 %s17, %s24
      %p178 = scmp.eq.s32.totalorder %s177, 0
      %s180 = sadd.s32 %s179, 1
      %s181 = scalar_select %p178, %s179, %s180
      %p184 = pneg %p178
      %p185 = scmp.eq.s32.totalorder %s17, 1
      %p186 = por %p184, %p185
      %p187 = scmp.ne.s32.totalorder %s179, %s182
      %p188 = scmp.eq.s32.totalorder %s17, 0
      %p189 = por %p187, %p188
      %p190 = scmp.ne.s32.totalorder %s179, %s182
      %p191 = scmp.eq.s32.totalorder %s22, 1
      %p192 = por %p190, %p191
      %p193 = scmp.ne.s32.totalorder %s182, %s183
      %p194 = scmp.eq.s32.totalorder %s22, 0
      %p195 = por %p193, %p194
      %p196 = scmp.ne.s32.totalorder %s182, %s183
      %p197 = scmp.eq.s32.totalorder %s23, 1
      %p198 = por %p196, %p197
      %p200 = scmp.ne.s32.totalorder %s183, %s199
      %p201 = scmp.eq.s32.totalorder %s23, 0
      %p202 = por %p200, %p201
      %p203 = scmp.le.s32.totalorder 1, %s17
      %p204 = scmp.lt.s32.totalorder %s17, 3
      %p205 = pnand %p203, %p204
      %p206 = pneg %p205
      // Predicated region
      $region9: #{tpu_custom_call.1} parent=5 // pred_check
        _
      $region10: #{tpu_custom_call.1} parent=5 // pred_check_branch
        %208 = sbr.rel (%p205) target = $region12
      $region11: #{tpu_custom_call.1} parent=5 // pred_region
        %s209 = ssub.s32 %s17, 1
        // Predicated region
        $region13: #{tpu_custom_call.1} parent=11 // pred_check
          %p210 = pneg %p64
        $region14: #{tpu_custom_call.1} parent=11 // pred_check_branch
          %212 = sbr.rel (%p210) target = $region16
        $region15: #{tpu_custom_call.1} parent=11 // pred_region
          _
        $region16: #{tpu_custom_call.1} parent=11 // pred_fallthru
          _
        // Predicated region
        $region17: #{tpu_custom_call.1} parent=11 // pred_check
          %p213 = pneg %p85
        $region18: #{tpu_custom_call.1} parent=11 // pred_check_branch
          %215 = sbr.rel (%p213) target = $region20
        $region19: #{tpu_custom_call.1} parent=11 // pred_region
          _
        $region20: #{tpu_custom_call.1} parent=11 // pred_fallthru
          _
        // Predicated region
        $region21: #{tpu_custom_call.1} parent=11 // pred_check
          %p216 = pneg %p106
        $region22: #{tpu_custom_call.1} parent=11 // pred_check_branch
          %218 = sbr.rel (%p216) target = $region24
        $region23: #{tpu_custom_call.1} parent=11 // pred_region
          %s220 = ssub.s32 4096, 4096
          %221 = vsyncadd [#allocation3], %s220
          %s222 = sshll.u32 [#allocation2], 4
          %s223 = int_to_ptr.vmem [resolvable:$true] %s222
          %228 = dma.hbm_to_vmem [thread:$0]  %s3, 4096, %s223, [#allocation3], 128, 128, 8
        $region24: #{tpu_custom_call.1} parent=11 // pred_fallthru
          _
        // Predicated region
        $region25: #{tpu_custom_call.1} parent=11 // pred_check
          %p229 = pneg %p127
        $region26: #{tpu_custom_call.1} parent=11 // pred_check_branch
          %231 = sbr.rel (%p229) target = $region28
        $region27: #{tpu_custom_call.1} parent=11 // pred_region
          _
        $region28: #{tpu_custom_call.1} parent=11 // pred_fallthru
          _
        // Predicated region
        $region29: #{tpu_custom_call.1} parent=11 // pred_check
          %p232 = pneg %p148
        $region30: #{tpu_custom_call.1} parent=11 // pred_check_branch
          %234 = sbr.rel (%p232) target = $region32
        $region31: #{tpu_custom_call.1} parent=11 // pred_region
          _
        $region32: #{tpu_custom_call.1} parent=11 // pred_fallthru
          _
        // Predicated region
        $region33: #{tpu_custom_call.1} parent=11 // pred_check
          %p235 = pneg %p169
        $region34: #{tpu_custom_call.1} parent=11 // pred_check_branch
          %237 = sbr.rel (%p235) target = $region36
        $region35: #{tpu_custom_call.1} parent=11 // pred_region
          _
        $region36: #{tpu_custom_call.1} parent=11 // pred_fallthru
          _
      $region12: #{tpu_custom_call.1} parent=5 // pred_fallthru
        _
      %p238 = scmp.lt.s32.totalorder %s17, 2
      // Predicated region
      $region37: #{tpu_custom_call.1} parent=5 // pred_check
        %p239 = pneg %p238
      $region38: #{tpu_custom_call.1} parent=5 // pred_check_branch
        %241 = sbr.rel (%p239) target = $region40
      $region39: #{tpu_custom_call.1} parent=5 // pred_region
        // Predicated region
        $region41: #{tpu_custom_call.1} parent=39 // pred_check
          %p242 = pneg %p37
        $region42: #{tpu_custom_call.1} parent=39 // pred_check_branch
          %244 = sbr.rel (%p242) target = $region44
        $region43: #{tpu_custom_call.1} parent=39 // pred_region
          %s245 = smul.u32 4, %s17
          %s246 = ssub.s32 7, %s245
          %p247 = scmp.lt.s32.totalorder %s246, 4
          %s248 = scalar_select %p247, %s246, 4
          %s249 = smul.u32 128, %s248
          %p250 = scmp.lt.s32.totalorder %s245, 6
          %s251 = scalar_select %p250, %s245, 6
          %s252 = smul.addr %s251, 8
          %s253 = scalar_lea.vmem %s0, %s252
          %s254 = smul.u32 4, %s17
          %s255 = ssub.s32 7, %s254
          %p256 = scmp.lt.s32.totalorder %s255, 4
          %s257 = scalar_select %p256, %s255, 4
          %s258 = smul.u32 128, %s257
        $region44: #{tpu_custom_call.1} parent=39 // pred_fallthru
          _
      $region40: #{tpu_custom_call.1} parent=5 // pred_fallthru
        _
      %p259 = scmp.le.s32.totalorder 1, %s17
      %p260 = scmp.lt.s32.totalorder %s17, 3
      %p261 = pnand %p259, %p260
      %p262 = pneg %p261
      // Predicated region
      $region45: #{tpu_custom_call.1} parent=5 // pred_check
        _
      $region46: #{tpu_custom_call.1} parent=5 // pred_check_branch
        %264 = sbr.rel (%p261) target = $region48
      $region47: #{tpu_custom_call.1} parent=5 // pred_region
        %s265 = ssub.s32 %s17, 1
        // Predicated region
        $region49: #{tpu_custom_call.1} parent=47 // pred_check
          %p266 = pneg %p106
        $region50: #{tpu_custom_call.1} parent=47 // pred_check_branch
          %268 = sbr.rel (%p266) target = $region52
        $region51: #{tpu_custom_call.1} parent=47 // pred_region
          %269 = dma.done [#allocation3], 4096
        $region52: #{tpu_custom_call.1} parent=47 // pred_fallthru
          _
        %s270 = smul.u32 4, %s22
        %s271 = ssub.s32 7, %s270
        %p272 = scmp.lt.s32.totalorder %s271, 4
        %s273 = scalar_select %p272, %s271, 4
        %s274 = smul.u32 128, %s273
        %p275 = scmp.lt.s32.totalorder %s270, 6
        %s276 = scalar_select %p275, %s270, 6
        %s277 = smul.addr %s276, 8
        %s278 = scalar_lea.vmem %s0, %s277
        %p279 = pneg %p43
        %p280 = pneg %p40
        %p281 = pneg %p64
        %p282 = pneg %p61
        %p283 = pneg %p85
        %p284 = pneg %p82
        %p285 = pneg %p106
        %p286 = pneg %p103
        %p287 = pneg %p127
        %p288 = pneg %p124
        %p289 = pneg %p148
        %p290 = pneg %p145
        %p291 = pneg %p169
        %p292 = pneg %p166
        %p293 = pneg %p195
        %p294 = pneg %p192
        %s295 = sand.u32 %s182, 1
        %s296 = scalar_lea.sflag [#allocation4], %s295
        %s297 = sand.u32 %s182, 1
        %s298 = smul.addr %s297, 32
        %s299 = scalar_lea.vmem [#allocation5], %s298
        %s300 = smul.u32 4, %s22
        %s301 = ssub.s32 7, %s300
        %p302 = scmp.lt.s32.totalorder %s301, 4
        %s303 = scalar_select %p302, %s301, 4
        %s304 = smul.u32 128, %s303
        %p305 = scmp.lt.s32.totalorder %s300, 6
        %s306 = scalar_select %p305, %s300, 6
        %s307 = smul.addr %s306, 8
        %s308 = scalar_lea.vmem %s0, %s307
        %s309 = smul.u32 4, %s22
        %s310 = ssub.s32 7, %s309
        %p311 = scmp.lt.s32.totalorder %s310, 4
        %s312 = scalar_select %p311, %s310, 4
        %s313 = smul.u32 128, %s312
        %s314 = smul.u32 4, %s22
        %s315 = ssub.s32 7, %s314
        %p316 = scmp.lt.s32.totalorder %s315, 4
        %s317 = scalar_select %p316, %s315, 4
        %s318 = smul.u32 128, %s317
        %v320 = vld [vmem:[%s308] sm:$0xff]
        %v321 = vld [vmem:[%s308 + $0x8] sm:$0xff]
        %v322 = vld [vmem:[%s308 + $0x10] sm:$0xff]
        %v323 = vld [vmem:[%s308 + $0x18] sm:$0xff]
        %v324 = vpack.c.bf16 %v321, %v320
        %v325 = vpack.c.bf16 %v323, %v322
        %v326 = vld [vmem:[%s1] sm:$0xff]
        %v327 = vld [vmem:[%s1 + $0x8] sm:$0xff]
        %v328 = vld [vmem:[%s1 + $0x10] sm:$0xff]
        %v329 = vld [vmem:[%s1 + $0x18] sm:$0xff]
        %v330 = vld [vmem:[%s1 + $0x20] sm:$0xff]
        %v331 = vld [vmem:[%s1 + $0x28] sm:$0xff]
        %v332 = vld [vmem:[%s1 + $0x30] sm:$0xff]
        %v333 = vld [vmem:[%s1 + $0x38] sm:$0xff]
        %v334 = vld [vmem:[%s1 + $0x40] sm:$0xff]
        %v335 = vld [vmem:[%s1 + $0x48] sm:$0xff]
        %v336 = vld [vmem:[%s1 + $0x50] sm:$0xff]
        %v337 = vld [vmem:[%s1 + $0x58] sm:$0xff]
        %v338 = vld [vmem:[%s1 + $0x60] sm:$0xff]
        %v339 = vld [vmem:[%s1 + $0x68] sm:$0xff]
        %v340 = vld [vmem:[%s1 + $0x70] sm:$0xff]
        %v341 = vld [vmem:[%s1 + $0x78] sm:$0xff]
        %v342 = vld [vmem:[%s2] sm:$0x3]
        %v344 = vlaneseq
        %v345 = vshrl.u32 %v344, 7
        %v346 = vsub.s32 0, %v345
        %v347 = vrot.slane %v342, %v346
        %v348 = vlaneseq
        %v349 = vshrl.u32 %v348, 7
        %v350 = vsub.s32 1, %v349
        %v351 = vrot.slane %v342, %v350
        %v370 = vunpack.c.l.b16 %v326
        %v371 = vunpack.c.h.b16 %v326
        %v372 = vunpack.c.l.b16 %v327
        %v373 = vunpack.c.h.b16 %v327
        %v374 = vunpack.c.l.b16 %v328
        %v375 = vunpack.c.h.b16 %v328
        %v376 = vunpack.c.l.b16 %v329
        %v377 = vunpack.c.h.b16 %v329
        %v378 = vunpack.c.l.b16 %v330
        %v379 = vunpack.c.h.b16 %v330
        %v380 = vunpack.c.l.b16 %v331
        %v381 = vunpack.c.h.b16 %v331
        %v382 = vunpack.c.l.b16 %v332
        %v383 = vunpack.c.h.b16 %v332
        %v384 = vunpack.c.l.b16 %v333
        %v385 = vunpack.c.h.b16 %v333
        %v386 = vunpack.c.l.b16 %v334
        %v387 = vunpack.c.h.b16 %v334
        %v388 = vunpack.c.l.b16 %v335
        %v389 = vunpack.c.h.b16 %v335
        %v390 = vunpack.c.l.b16 %v336
        %v391 = vunpack.c.h.b16 %v336
        %v392 = vunpack.c.l.b16 %v337
        %v393 = vunpack.c.h.b16 %v337
        %v394 = vunpack.c.l.b16 %v338
        %v395 = vunpack.c.h.b16 %v338
        %v396 = vunpack.c.l.b16 %v339
        %v397 = vunpack.c.h.b16 %v339
        %v398 = vunpack.c.l.b16 %v340
        %v399 = vunpack.c.h.b16 %v340
        %v400 = vunpack.c.l.b16 %v341
        %v401 = vunpack.c.h.b16 %v341
        %v402 = vpack.c.b16 %v372, %v370
        %v403 = vpack.c.b16 %v373, %v371
        %v404 = vpack.c.b16 %v376, %v374
        %v405 = vpack.c.b16 %v377, %v375
        %v406 = vpack.c.b16 %v380, %v378
        %v407 = vpack.c.b16 %v381, %v379
        %v408 = vpack.c.b16 %v384, %v382
        %v409 = vpack.c.b16 %v385, %v383
        %v410 = vpack.c.b16 %v388, %v386
        %v411 = vpack.c.b16 %v389, %v387
        %v412 = vpack.c.b16 %v392, %v390
        %v413 = vpack.c.b16 %v393, %v391
        %v414 = vpack.c.b16 %v396, %v394
        %v415 = vpack.c.b16 %v397, %v395
        %v416 = vpack.c.b16 %v400, %v398
        %v417 = vpack.c.b16 %v401, %v399
        %434 = vmatprep.subr.bf16.mxu0 %v403
        %435 = vmatpush1.bf16.msra.mxu0 %v402
        %436 = vmatprep.subr.bf16.mxu0 %v405
        %437 = vmatpush1.bf16.msra.mxu0 %v404
        %438 = vmatprep.subr.bf16.mxu0 %v407
        %439 = vmatpush1.bf16.msra.mxu0 %v406
        %440 = vmatprep.subr.bf16.mxu0 %v409
        %441 = vmatpush1.bf16.msra.mxu0 %v408
        %442 = vmatprep.subr.bf16.mxu0 %v411
        %443 = vmatpush1.bf16.msra.mxu0 %v410
        %444 = vmatprep.subr.bf16.mxu0 %v413
        %445 = vmatpush1.bf16.msra.mxu0 %v412
        %446 = vmatprep.subr.bf16.mxu0 %v415
        %447 = vmatpush1.bf16.msra.mxu0 %v414
        %448 = vmatprep.subr.bf16.mxu0 %v417
        %449 = vmatpush1.bf16.msra.mxu0 %v416
        %450 = vmatprep.subr.bf16.mxu0 0
        %451 = vmatpush1.bf16.msra.mxu0 0
        %452 = vmatprep.subr.bf16.mxu0 0
        %453 = vmatpush1.bf16.msra.mxu0 0
        %454 = vmatprep.subr.bf16.mxu0 0
        %455 = vmatpush1.bf16.msra.mxu0 0
        %456 = vmatprep.subr.bf16.mxu0 0
        %457 = vmatpush1.bf16.msra.mxu0 0
        %458 = vmatprep.subr.bf16.mxu0 0
        %459 = vmatpush1.bf16.msra.mxu0 0
        %460 = vmatprep.subr.bf16.mxu0 0
        %461 = vmatpush1.bf16.msra.mxu0 0
        %462 = vmatprep.subr.bf16.mxu0 0
        %463 = vmatpush1.bf16.msra.mxu0 0
        %464 = vmatprep.subr.bf16.mxu0 0
        %465 = vmatpush1.bf16.msra.mxu0 0
        %466 = vmatprep.mubr.bf16.mxu0 0
        %467 = vmatmul.mubr.bf16.gmra.mrb[0].mxu0 %v324
        %v468 = vpop.f32.mrb[0].mxu0
        %v469 = vadd.f32 %v347, %v468
        %v470 = vpop.f32.mrb[0].mxu0
        %v471 = vadd.f32 %v351, %v470
        %v472 = vpop.f32.mrb[0].mxu0
        %v473 = vadd.f32 %v347, %v472
        %v474 = vpop.f32.mrb[0].mxu0
        %v475 = vadd.f32 %v351, %v474
        %476 = vmatprep.mubr.bf16.mxu0 0
        %477 = vmatmul.mubr.bf16.gmra.mrb[0].mxu0 %v325
        %v478 = vpop.f32.mrb[0].mxu0
        %v479 = vadd.f32 %v347, %v478
        %v480 = vpop.f32.mrb[0].mxu0
        %v481 = vadd.f32 %v351, %v480
        %v482 = vpop.f32.mrb[0].mxu0
        %v483 = vadd.f32 %v347, %v482
        %v484 = vpop.f32.mrb[0].mxu0
        %v485 = vadd.f32 %v351, %v484
        %486 = vdwg.mxu0
        %v487 = vmax.f32 %v469, 0.0
        %v488 = vmax.f32 %v471, 0.0
        %v489 = vmax.f32 %v473, 0.0
        %v490 = vmax.f32 %v475, 0.0
        %v491 = vmax.f32 %v479, 0.0
        %v492 = vmax.f32 %v481, 0.0
        %v493 = vmax.f32 %v483, 0.0
        %v494 = vmax.f32 %v485, 0.0
        %v495 = vpack.c.bf16 %v489, %v487
        %v496 = vpack.c.bf16 %v490, %v488
        %v497 = vpack.c.bf16 %v493, %v491
        %v498 = vpack.c.bf16 %v494, %v492
        %v499 = vld [vmem:[#allocation2] sm:$0xff]
        %v500 = vld [vmem:[#allocation2 + $0x8] sm:$0xff]
        %v501 = vld [vmem:[#allocation2 + $0x10] sm:$0xff]
        %v502 = vld [vmem:[#allocation2 + $0x18] sm:$0xff]
        %v503 = vld [vmem:[#allocation2 + $0x20] sm:$0xff]
        %v504 = vld [vmem:[#allocation2 + $0x28] sm:$0xff]
        %v505 = vld [vmem:[#allocation2 + $0x30] sm:$0xff]
        %v506 = vld [vmem:[#allocation2 + $0x38] sm:$0xff]
        %v507 = vld [vmem:[#allocation2 + $0x40] sm:$0xff]
        %v508 = vld [vmem:[#allocation2 + $0x48] sm:$0xff]
        %v509 = vld [vmem:[#allocation2 + $0x50] sm:$0xff]
        %v510 = vld [vmem:[#allocation2 + $0x58] sm:$0xff]
        %v511 = vld [vmem:[#allocation2 + $0x60] sm:$0xff]
        %v512 = vld [vmem:[#allocation2 + $0x68] sm:$0xff]
        %v513 = vld [vmem:[#allocation2 + $0x70] sm:$0xff]
        %v514 = vld [vmem:[#allocation2 + $0x78] sm:$0xff]
        %v515 = vld [vmem:[#allocation2 + $0x80] sm:$0xff]
        %v516 = vld [vmem:[#allocation2 + $0x88] sm:$0xff]
        %v517 = vld [vmem:[#allocation2 + $0x90] sm:$0xff]
        %v518 = vld [vmem:[#allocation2 + $0x98] sm:$0xff]
        %v519 = vld [vmem:[#allocation2 + $0xa0] sm:$0xff]
        %v520 = vld [vmem:[#allocation2 + $0xa8] sm:$0xff]
        %v521 = vld [vmem:[#allocation2 + $0xb0] sm:$0xff]
        %v522 = vld [vmem:[#allocation2 + $0xb8] sm:$0xff]
        %v523 = vld [vmem:[#allocation2 + $0xc0] sm:$0xff]
        %v524 = vld [vmem:[#allocation2 + $0xc8] sm:$0xff]
        %v525 = vld [vmem:[#allocation2 + $0xd0] sm:$0xff]
        %v526 = vld [vmem:[#allocation2 + $0xd8] sm:$0xff]
        %v527 = vld [vmem:[#allocation2 + $0xe0] sm:$0xff]
        %v528 = vld [vmem:[#allocation2 + $0xe8] sm:$0xff]
        %v529 = vld [vmem:[#allocation2 + $0xf0] sm:$0xff]
        %v530 = vld [vmem:[#allocation2 + $0xf8] sm:$0xff]
        %v531 = vld [vmem:[%s4] sm:$0x3]
        %v533 = vlaneseq
        %v534 = vshrl.u32 %v533, 7
        %v535 = vsub.s32 0, %v534
        %v536 = vrot.slane %v531, %v535
        %v537 = vlaneseq
        %v538 = vshrl.u32 %v537, 7
        %v539 = vsub.s32 1, %v538
        %v540 = vrot.slane %v531, %v539
        %v575 = vunpack.c.l.b16 %v499
        %v576 = vunpack.c.h.b16 %v499
        %v577 = vunpack.c.l.b16 %v500
        %v578 = vunpack.c.h.b16 %v500
        %v579 = vunpack.c.l.b16 %v501
        %v580 = vunpack.c.h.b16 %v501
        %v581 = vunpack.c.l.b16 %v502
        %v582 = vunpack.c.h.b16 %v502
        %v583 = vunpack.c.l.b16 %v503
        %v584 = vunpack.c.h.b16 %v503
        %v585 = vunpack.c.l.b16 %v504
        %v586 = vunpack.c.h.b16 %v504
        %v587 = vunpack.c.l.b16 %v505
        %v588 = vunpack.c.h.b16 %v505
        %v589 = vunpack.c.l.b16 %v506
        %v590 = vunpack.c.h.b16 %v506
        %v591 = vunpack.c.l.b16 %v507
        %v592 = vunpack.c.h.b16 %v507
        %v593 = vunpack.c.l.b16 %v508
        %v594 = vunpack.c.h.b16 %v508
        %v595 = vunpack.c.l.b16 %v509
        %v596 = vunpack.c.h.b16 %v509
        %v597 = vunpack.c.l.b16 %v510
        %v598 = vunpack.c.h.b16 %v510
        %v599 = vunpack.c.l.b16 %v511
        %v600 = vunpack.c.h.b16 %v511
        %v601 = vunpack.c.l.b16 %v512
        %v602 = vunpack.c.h.b16 %v512
        %v603 = vunpack.c.l.b16 %v513
        %v604 = vunpack.c.h.b16 %v513
        %v605 = vunpack.c.l.b16 %v514
        %v606 = vunpack.c.h.b16 %v514
        %v607 = vunpack.c.l.b16 %v515
        %v608 = vunpack.c.h.b16 %v515
        %v609 = vunpack.c.l.b16 %v516
        %v610 = vunpack.c.h.b16 %v516
        %v611 = vunpack.c.l.b16 %v517
        %v612 = vunpack.c.h.b16 %v517
        %v613 = vunpack.c.l.b16 %v518
        %v614 = vunpack.c.h.b16 %v518
        %v615 = vunpack.c.l.b16 %v519
        %v616 = vunpack.c.h.b16 %v519
        %v617 = vunpack.c.l.b16 %v520
        %v618 = vunpack.c.h.b16 %v520
        %v619 = vunpack.c.l.b16 %v521
        %v620 = vunpack.c.h.b16 %v521
        %v621 = vunpack.c.l.b16 %v522
        %v622 = vunpack.c.h.b16 %v522
        %v623 = vunpack.c.l.b16 %v523
        %v624 = vunpack.c.h.b16 %v523
        %v625 = vunpack.c.l.b16 %v524
        %v626 = vunpack.c.h.b16 %v524
        %v627 = vunpack.c.l.b16 %v525
        %v628 = vunpack.c.h.b16 %v525
        %v629 = vunpack.c.l.b16 %v526
        %v630 = vunpack.c.h.b16 %v526
        %v631 = vunpack.c.l.b16 %v527
        %v632 = vunpack.c.h.b16 %v527
        %v633 = vunpack.c.l.b16 %v528
        %v634 = vunpack.c.h.b16 %v528
        %v635 = vunpack.c.l.b16 %v529
        %v636 = vunpack.c.h.b16 %v529
        %v637 = vunpack.c.l.b16 %v530
        %v638 = vunpack.c.h.b16 %v530
        %v639 = vpack.c.b16 %v577, %v575
        %v640 = vpack.c.b16 %v578, %v576
        %v641 = vpack.c.b16 %v581, %v579
        %v642 = vpack.c.b16 %v582, %v580
        %v643 = vpack.c.b16 %v585, %v583
        %v644 = vpack.c.b16 %v586, %v584
        %v645 = vpack.c.b16 %v589, %v587
        %v646 = vpack.c.b16 %v590, %v588
        %v647 = vpack.c.b16 %v593, %v591
        %v648 = vpack.c.b16 %v594, %v592
        %v649 = vpack.c.b16 %v597, %v595
        %v650 = vpack.c.b16 %v598, %v596
        %v651 = vpack.c.b16 %v601, %v599
        %v652 = vpack.c.b16 %v602, %v600
        %v653 = vpack.c.b16 %v605, %v603
        %v654 = vpack.c.b16 %v606, %v604
        %v655 = vpack.c.b16 %v609, %v607
        %v656 = vpack.c.b16 %v610, %v608
        %v657 = vpack.c.b16 %v613, %v611
        %v658 = vpack.c.b16 %v614, %v612
        %v659 = vpack.c.b16 %v617, %v615
        %v660 = vpack.c.b16 %v618, %v616
        %v661 = vpack.c.b16 %v621, %v619
        %v662 = vpack.c.b16 %v622, %v620
        %v663 = vpack.c.b16 %v625, %v623
        %v664 = vpack.c.b16 %v626, %v624
        %v665 = vpack.c.b16 %v629, %v627
        %v666 = vpack.c.b16 %v630, %v628
        %v667 = vpack.c.b16 %v633, %v631
        %v668 = vpack.c.b16 %v634, %v632
        %v669 = vpack.c.b16 %v637, %v635
        %v670 = vpack.c.b16 %v638, %v636
        %703 = vmatprep.subr.bf16.mxu0 %v640
        %704 = vmatpush1.bf16.msra.mxu0 %v639
        %705 = vmatprep.subr.bf16.mxu0 %v642
        %706 = vmatpush1.bf16.msra.mxu0 %v641
        %707 = vmatprep.subr.bf16.mxu0 %v644
        %708 = vmatpush1.bf16.msra.mxu0 %v643
        %709 = vmatprep.subr.bf16.mxu0 %v646
        %710 = vmatpush1.bf16.msra.mxu0 %v645
        %711 = vmatprep.subr.bf16.mxu0 %v648
        %712 = vmatpush1.bf16.msra.mxu0 %v647
        %713 = vmatprep.subr.bf16.mxu0 %v650
        %714 = vmatpush1.bf16.msra.mxu0 %v649
        %715 = vmatprep.subr.bf16.mxu0 %v652
        %716 = vmatpush1.bf16.msra.mxu0 %v651
        %717 = vmatprep.subr.bf16.mxu0 %v654
        %718 = vmatpush1.bf16.msra.mxu0 %v653
        %719 = vmatprep.subr.bf16.mxu0 %v656
        %720 = vmatpush1.bf16.msra.mxu0 %v655
        %721 = vmatprep.subr.bf16.mxu0 %v658
        %722 = vmatpush1.bf16.msra.mxu0 %v657
        %723 = vmatprep.subr.bf16.mxu0 %v660
        %724 = vmatpush1.bf16.msra.mxu0 %v659
        %725 = vmatprep.subr.bf16.mxu0 %v662
        %726 = vmatpush1.bf16.msra.mxu0 %v661
        %727 = vmatprep.subr.bf16.mxu0 %v664
        %728 = vmatpush1.bf16.msra.mxu0 %v663
        %729 = vmatprep.subr.bf16.mxu0 %v666
        %730 = vmatpush1.bf16.msra.mxu0 %v665
        %731 = vmatprep.subr.bf16.mxu0 %v668
        %732 = vmatpush1.bf16.msra.mxu0 %v667
        %733 = vmatprep.subr.bf16.mxu0 %v670
        %734 = vmatpush1.bf16.msra.mxu0 %v669
        %735 = vmatprep.mubr.bf16.mxu0 %v496
        %736 = vmatmul.mubr.bf16.gmra.mrb[0].mxu0 %v495
        %v737 = vpop.f32.mrb[0].mxu0
        %v738 = vadd.f32 %v536, %v737
        %v739 = vpop.f32.mrb[0].mxu0
        %v740 = vadd.f32 %v540, %v739
        %v741 = vpop.f32.mrb[0].mxu0
        %v742 = vadd.f32 %v536, %v741
        %v743 = vpop.f32.mrb[0].mxu0
        %v744 = vadd.f32 %v540, %v743
        %745 = vmatprep.mubr.bf16.mxu0 %v498
        %746 = vmatmul.mubr.bf16.gmra.mrb[0].mxu0 %v497
        %v747 = vpop.f32.mrb[0].mxu0
        %v748 = vadd.f32 %v536, %v747
        %v749 = vpop.f32.mrb[0].mxu0
        %v750 = vadd.f32 %v540, %v749
        %v751 = vpop.f32.mrb[0].mxu0
        %v752 = vadd.f32 %v536, %v751
        %v753 = vpop.f32.mrb[0].mxu0
        %v754 = vadd.f32 %v540, %v753
        %755 = vdwg.mxu0
        %v756 = vmax.f32 %v738, 0.0
        %v757 = vmax.f32 %v740, 0.0
        %v758 = vmax.f32 %v742, 0.0
        %v759 = vmax.f32 %v744, 0.0
        %v760 = vmax.f32 %v748, 0.0
        %v761 = vmax.f32 %v750, 0.0
        %v762 = vmax.f32 %v752, 0.0
        %v763 = vmax.f32 %v754, 0.0
        %v764 = vpack.c.bf16 %v758, %v756
        %v765 = vpack.c.bf16 %v759, %v757
        %v766 = vpack.c.bf16 %v762, %v760
        %v767 = vpack.c.bf16 %v763, %v761
        %v768 = vld [vmem:[%s5] sm:$0xf]
        %v769 = vld [vmem:[%s5 + $0x4] sm:$0xf]
        %v770 = vld [vmem:[%s5 + $0x8] sm:$0xf]
        %v771 = vld [vmem:[%s5 + $0xc] sm:$0xf]
        %v772 = vld [vmem:[%s5 + $0x10] sm:$0xf]
        %v773 = vld [vmem:[%s5 + $0x14] sm:$0xf]
        %v774 = vld [vmem:[%s5 + $0x18] sm:$0xf]
        %v775 = vld [vmem:[%s5 + $0x1c] sm:$0xf]
        %v776 = vld [vmem:[%s5 + $0x20] sm:$0xf]
        %v777 = vld [vmem:[%s5 + $0x24] sm:$0xf]
        %v778 = vld [vmem:[%s5 + $0x28] sm:$0xf]
        %v779 = vld [vmem:[%s5 + $0x2c] sm:$0xf]
        %v780 = vld [vmem:[%s5 + $0x30] sm:$0xf]
        %v781 = vld [vmem:[%s5 + $0x34] sm:$0xf]
        %v782 = vld [vmem:[%s5 + $0x38] sm:$0xf]
        %v783 = vld [vmem:[%s5 + $0x3c] sm:$0xf]
        %v784 = vld [vmem:[%s5 + $0x40] sm:$0xf]
        %v785 = vld [vmem:[%s5 + $0x44] sm:$0xf]
        %v786 = vld [vmem:[%s5 + $0x48] sm:$0xf]
        %v787 = vld [vmem:[%s5 + $0x4c] sm:$0xf]
        %v788 = vld [vmem:[%s5 + $0x50] sm:$0xf]
        %v789 = vld [vmem:[%s5 + $0x54] sm:$0xf]
        %v790 = vld [vmem:[%s5 + $0x58] sm:$0xf]
        %v791 = vld [vmem:[%s5 + $0x5c] sm:$0xf]
        %v792 = vld [vmem:[%s5 + $0x60] sm:$0xf]
        %v793 = vld [vmem:[%s5 + $0x64] sm:$0xf]
        %v794 = vld [vmem:[%s5 + $0x68] sm:$0xf]
        %v795 = vld [vmem:[%s5 + $0x6c] sm:$0xf]
        %v796 = vld [vmem:[%s5 + $0x70] sm:$0xf]
        %v797 = vld [vmem:[%s5 + $0x74] sm:$0xf]
        %v798 = vld [vmem:[%s5 + $0x78] sm:$0xf]
        %v799 = vld [vmem:[%s5 + $0x7c] sm:$0xf]
        %v800 = vld [vmem:[%s6] sm:$0x1]
        %v802 = vlaneseq
        %v803 = vshrl.u32 %v802, 7
        %v804 = vsub.s32 0, %v803
        %v805 = vrot.slane %v800, %v804
        %v839 = vunpack.c.l.b16 %v768
        %v840 = vunpack.c.l.b16 %v769
        %v841 = vunpack.c.l.b16 %v770
        %v842 = vunpack.c.l.b16 %v771
        %v843 = vunpack.c.l.b16 %v772
        %v844 = vunpack.c.l.b16 %v773
        %v845 = vunpack.c.l.b16 %v774
        %v846 = vunpack.c.l.b16 %v775
        %v847 = vunpack.c.l.b16 %v776
        %v848 = vunpack.c.l.b16 %v777
        %v849 = vunpack.c.l.b16 %v778
        %v850 = vunpack.c.l.b16 %v779
        %v851 = vunpack.c.l.b16 %v780
        %v852 = vunpack.c.l.b16 %v781
        %v853 = vunpack.c.l.b16 %v782
        %v854 = vunpack.c.l.b16 %v783
        %v855 = vunpack.c.l.b16 %v784
        %v856 = vunpack.c.l.b16 %v785
        %v857 = vunpack.c.l.b16 %v786
        %v858 = vunpack.c.l.b16 %v787
        %v859 = vunpack.c.l.b16 %v788
        %v860 = vunpack.c.l.b16 %v789
        %v861 = vunpack.c.l.b16 %v790
        %v862 = vunpack.c.l.b16 %v791
        %v863 = vunpack.c.l.b16 %v792
        %v864 = vunpack.c.l.b16 %v793
        %v865 = vunpack.c.l.b16 %v794
        %v866 = vunpack.c.l.b16 %v795
        %v867 = vunpack.c.l.b16 %v796
        %v868 = vunpack.c.l.b16 %v797
        %v869 = vunpack.c.l.b16 %v798
        %v870 = vunpack.c.l.b16 %v799
        %v871 = vpack.c.b16 %v840, %v839
        %v872 = vpack.c.b16 %v842, %v841
        %v873 = vpack.c.b16 %v844, %v843
        %v874 = vpack.c.b16 %v846, %v845
        %v875 = vpack.c.b16 %v848, %v847
        %v876 = vpack.c.b16 %v850, %v849
        %v877 = vpack.c.b16 %v852, %v851
        %v878 = vpack.c.b16 %v854, %v853
        %v879 = vpack.c.b16 %v856, %v855
        %v880 = vpack.c.b16 %v858, %v857
        %v881 = vpack.c.b16 %v860, %v859
        %v882 = vpack.c.b16 %v862, %v861
        %v883 = vpack.c.b16 %v864, %v863
        %v884 = vpack.c.b16 %v866, %v865
        %v885 = vpack.c.b16 %v868, %v867
        %v886 = vpack.c.b16 %v870, %v869
        %903 = vmatprep.subr.bf16.mxu0 0
        %904 = vmatpush1.bf16.msra.mxu0 %v871
        %905 = vmatprep.subr.bf16.mxu0 0
        %906 = vmatpush1.bf16.msra.mxu0 %v872
        %907 = vmatprep.subr.bf16.mxu0 0
        %908 = vmatpush1.bf16.msra.mxu0 %v873
        %909 = vmatprep.subr.bf16.mxu0 0
        %910 = vmatpush1.bf16.msra.mxu0 %v874
        %911 = vmatprep.subr.bf16.mxu0 0
        %912 = vmatpush1.bf16.msra.mxu0 %v875
        %913 = vmatprep.subr.bf16.mxu0 0
        %914 = vmatpush1.bf16.msra.mxu0 %v876
        %915 = vmatprep.subr.bf16.mxu0 0
        %916 = vmatpush1.bf16.msra.mxu0 %v877
        %917 = vmatprep.subr.bf16.mxu0 0
        %918 = vmatpush1.bf16.msra.mxu0 %v878
        %919 = vmatprep.subr.bf16.mxu0 0
        %920 = vmatpush1.bf16.msra.mxu0 %v879
        %921 = vmatprep.subr.bf16.mxu0 0
        %922 = vmatpush1.bf16.msra.mxu0 %v880
        %923 = vmatprep.subr.bf16.mxu0 0
        %924 = vmatpush1.bf16.msra.mxu0 %v881
        %925 = vmatprep.subr.bf16.mxu0 0
        %926 = vmatpush1.bf16.msra.mxu0 %v882
        %927 = vmatprep.subr.bf16.mxu0 0
        %928 = vmatpush1.bf16.msra.mxu0 %v883
        %929 = vmatprep.subr.bf16.mxu0 0
        %930 = vmatpush1.bf16.msra.mxu0 %v884
        %931 = vmatprep.subr.bf16.mxu0 0
        %932 = vmatpush1.bf16.msra.mxu0 %v885
        %933 = vmatprep.subr.bf16.mxu0 0
        %934 = vmatpush1.bf16.msra.mxu0 %v886
        %935 = vmatprep.mubr.bf16.mxu0 %v765
        %936 = vmatmul.mubr.bf16.gmra.mrb[0].mxu0 %v764
        %v937 = vpop.f32.mrb[0].mxu0
        %v938 = vadd.f32 %v805, %v937
        %v939 = vpop.f32.mrb[0].mxu0
        %v940 = vpop.f32.mrb[0].mxu0
        %v941 = vadd.f32 %v805, %v940
        %v942 = vpop.f32.mrb[0].mxu0
        %943 = vmatprep.mubr.bf16.mxu0 %v767
        %944 = vmatmul.mubr.bf16.gmra.mrb[0].mxu0 %v766
        %v945 = vpop.f32.mrb[0].mxu0
        %v946 = vadd.f32 %v805, %v945
        %v947 = vpop.f32.mrb[0].mxu0
        %v948 = vpop.f32.mrb[0].mxu0
        %v949 = vadd.f32 %v805, %v948
        %v950 = vpop.f32.mrb[0].mxu0
        %951 = vdwg.mxu0
        %vm952 = vcmask 523264
        %953 = vst.msk [vmem:[%s299] sm:$0xff] %vm952, %v938
        %954 = vst.msk [vmem:[%s299 + $0x8] sm:$0xff] %vm952, %v941
        %955 = vst.msk [vmem:[%s299 + $0x10] sm:$0xff] %vm952, %v946
        %956 = vst.msk [vmem:[%s299 + $0x18] sm:$0xff] %vm952, %v949
        %s957 = sand.u32 %s182, 1
        %s958 = scalar_lea.sflag [#allocation4], %s957
        %s959 = sand.u32 %s182, 1
        %s960 = smul.addr %s959, 32
        %s961 = scalar_lea.vmem [#allocation5], %s960
        // Predicated region
        $region53: #{tpu_custom_call.1} parent=47 // pred_check
          %p962 = pneg %p192
        $region54: #{tpu_custom_call.1} parent=47 // pred_check_branch
          %964 = sbr.rel (%p962) target = $region56
        $region55: #{tpu_custom_call.1} parent=47 // pred_region
          %s965 = smul.u32 4, %s22
          %s966 = ssub.s32 7, %s965
          %p967 = scmp.lt.s32.totalorder %s966, 4
          %s968 = scalar_select %p967, %s966, 4
          %s969 = smul.u32 128, %s968
          %s971 = ssub.s32 512, %s969
          %972 = vsyncadd %s958, %s971
          %p973 = scmp.ne.s32.totalorder 0, %s969
          %s974 = smul.addr %s965, 128
          %s975 = scalar_lea.hbm %s7, %s974
          %s976 = smul.u32 8, %s968
          %s977 = sshll.u32 %s961, 4
          %s978 = int_to_ptr.vmem [resolvable:$true] %s977
          %s979 = sshll.u32 %s976, 4
          %983 = dma.vmem_to_hbm [thread:$0]  (%p973), %s978, %s979, %s975, %s958, 128, 128, 8
        $region56: #{tpu_custom_call.1} parent=47 // pred_fallthru
          _
      $region48: #{tpu_custom_call.1} parent=5 // pred_fallthru
        _
      %p984 = scmp.le.s32.totalorder 2, %s17
      // Predicated region
      $region57: #{tpu_custom_call.1} parent=5 // pred_check
        %p985 = pneg %p984
      $region58: #{tpu_custom_call.1} parent=5 // pred_check_branch
        %987 = sbr.rel (%p985) target = $region60
      $region59: #{tpu_custom_call.1} parent=5 // pred_region
        %s988 = ssub.s32 %s17, 2
        // Predicated region
        $region61: #{tpu_custom_call.1} parent=59 // pred_check
          %p989 = pneg %p198
        $region62: #{tpu_custom_call.1} parent=59 // pred_check_branch
          %991 = sbr.rel (%p989) target = $region64
        $region63: #{tpu_custom_call.1} parent=59 // pred_region
          %s992 = sand.u32 %s183, 1
          %s993 = scalar_lea.sflag [#allocation4], %s992
          %s994 = sand.u32 %s183, 1
          %s995 = smul.addr %s994, 32
          %s996 = scalar_lea.vmem [#allocation5], %s995
          %997 = dma.done %s993, 512
        $region64: #{tpu_custom_call.1} parent=59 // pred_fallthru
          _
      $region60: #{tpu_custom_call.1} parent=5 // pred_fallthru
        _
    $region6: #{tpu_custom_call.1} parent=1 // loop_footer
      %s21 = sadd.s32 1, %s17
    $region7: #{tpu_custom_call.1} parent=1 // loop_footer_branch
      %16 = sbr.rel target = $region3
    $region8: #{tpu_custom_call.1} parent=1 // loop_exit
      _
    %998 = vsyncpa [#allocation3], 1
    %s999 = scalar_lea.sflag [#allocation3], 1
    %1000 = vsyncpa %s999, 1
    %1001 = vsyncpa [#allocation4], 1
    %s1002 = scalar_lea.sflag [#allocation4], 1
    %1003 = vsyncpa %s1002, 1

</llo_original>
